<compile_context>
chip_gen: v7x
topology: tpu7x:2x2x1
jax: 0.10.0
libtpu: 0.0.40
codegen_flags: <defaults>
</compile_context>

<pallas_src>
import math

import jax
import jax.numpy as jnp
from jax.experimental import pallas as pl
from jax.experimental.pallas import tpu as pltpu


def _mlp_fused_kernel(x_ref,
                      w1_ref, b1_ref,
                      w2_ref, b2_ref,
                      w3_ref, b3_ref,
                      w4_ref, b4_ref,
                      o_ref):
    """Fused 4-layer MLP: ((x@W1+b1)+ -> (@W2+b2)+ -> (@W3+b3)+ -> @W4+b4)."""
    h = jnp.dot(x_ref[...], w1_ref[...], preferred_element_type=jnp.float32)
    h = jnp.maximum(h + b1_ref[...], 0.0)

    h = jnp.dot(h, w2_ref[...], preferred_element_type=jnp.float32)
    h = jnp.maximum(h + b2_ref[...], 0.0)

    h = jnp.dot(h, w3_ref[...], preferred_element_type=jnp.float32)
    h = jnp.maximum(h + b3_ref[...], 0.0)

    out = jnp.dot(h, w4_ref[...], preferred_element_type=jnp.float32) + b4_ref[...]
    o_ref[...] = out.astype(o_ref.dtype)


def mlp_forward(x, params):
    """x: (M, n_input) f32; params: 4 tuples of (W (in,out), b (out,)) f32."""
    (w1, b1), (w2, b2), (w3, b3), (w4, b4) = params
    M = x.shape[0]
    n_out = w4.shape[1]

    # Pad the predict layer to a lane-dense (multiple of 128) output width so the
    # final store is an unmasked vst; the extra columns are exactly zero and sliced off.
    n_pad = max(128, ((n_out + 127) // 128) * 128)
    if n_pad != n_out:
        w4p = jnp.zeros((w4.shape[0], n_pad), w4.dtype).at[:, :n_out].set(w4)
        b4p = jnp.zeros((n_pad,), b4.dtype).at[:n_out].set(b4)
    else:
        w4p, b4p = w4, b4

    # Whole arrays resident in VMEM; single kernel invocation (no grid).
    vmem_spec = pl.BlockSpec(memory_space=pltpu.MemorySpace.VMEM)

    out_padded = pl.pallas_call(
        _mlp_fused_kernel,
        out_shape=jax.ShapeDtypeStruct((M, n_pad), jnp.float32),
        in_specs=[vmem_spec] * 9,
        out_specs=vmem_spec,
    )(
        x,
        w1, b1.reshape(1, -1),
        w2, b2.reshape(1, -1),
        w3, b3.reshape(1, -1),
        w4p, b4p.reshape(1, -1),
    )
    return out_padded[:, :n_out]


def init_linear_params(key, in_features, out_features):
    """Deterministic PyTorch-style init: U(-1/sqrt(fan_in), 1/sqrt(fan_in)).

    Stored as (in_features, out_features) -- transposed vs. torch's (out, in).
    """
    kw, kb = jax.random.split(key)
    bound = 1.0 / math.sqrt(in_features)
    w = jax.random.uniform(kw, (in_features, out_features), jnp.float32,
                           minval=-bound, maxval=bound)
    b = jax.random.uniform(kb, (out_features,), jnp.float32,
                           minval=-bound, maxval=bound)
    return w, b


def mlp_reference(x, params):
    """Plain-JAX reference of the same forward pass."""
    (w1, b1), (w2, b2), (w3, b3), (w4, b4) = params
    out = jnp.maximum(x @ w1 + b1, 0.0)
    out = jnp.maximum(out @ w2 + b2, 0.0)
    out = jnp.maximum(out @ w3 + b3, 0.0)
    out = out @ w4 + b4
    return out


if __name__ == "__main__":
    batch = 8
    n_input = 32
    n_output = 8

    key = jax.random.PRNGKey(0)
    kx, k1, k2, k3, k4 = jax.random.split(key, 5)

    x = jax.random.normal(kx, (batch, n_input), jnp.float32)

    params = (
        init_linear_params(k1, n_input, 512),   # hidden1
        init_linear_params(k2, 512, 256),       # hidden2
        init_linear_params(k3, 256, 128),       # hidden3
        init_linear_params(k4, 128, n_output),  # predict
    )

    out = mlp_forward(x, params)
    out = jax.block_until_ready(out)

    ref = mlp_reference(x, params)
    assert out.shape == (batch, n_output)
    assert jnp.allclose(out, ref, atol=1e-5, rtol=1e-5), "mismatch vs reference"

    print("KERNEL_OK")
</pallas_src>

<mosaic_0001>
module attributes {stable_mosaic.version = 11 : i64} {
  func.func @_mlp_fused_kernel(%arg0: memref<8x32xf32, #tpu.memory_space<vmem>>, %arg1: memref<32x512xf32, #tpu.memory_space<vmem>>, %arg2: memref<1x512xf32, #tpu.memory_space<vmem>>, %arg3: memref<512x256xf32, #tpu.memory_space<vmem>>, %arg4: memref<1x256xf32, #tpu.memory_space<vmem>>, %arg5: memref<256x128xf32, #tpu.memory_space<vmem>>, %arg6: memref<1x128xf32, #tpu.memory_space<vmem>>, %arg7: memref<128x128xf32, #tpu.memory_space<vmem>>, %arg8: memref<1x128xf32, #tpu.memory_space<vmem>>, %arg9: memref<8x128xf32, #tpu.memory_space<vmem>>) attributes {dimension_semantics = [], scalar_prefetch = 0 : i64, scratch_operands = 0 : i64, tpu.core_type = #tpu.core_type<tc>} {
    %c0 = arith.constant 0 : index
    %c0_0 = arith.constant 0 : index
    %0 = vector.load %arg0[%c0, %c0_0] : memref<8x32xf32, #tpu.memory_space<vmem>>, vector<8x32xf32>
    %c0_1 = arith.constant 0 : index
    %c0_2 = arith.constant 0 : index
    %1 = vector.load %arg1[%c0_1, %c0_2] : memref<32x512xf32, #tpu.memory_space<vmem>>, vector<32x512xf32>
    %cst = arith.constant dense<0.000000e+00> : vector<8x512xf32>
    %2 = tpu.matmul %0, %1, %cst {dimension_numbers = #tpu.dot_dimension_numbers<[1], [0], [0], [1], [0, 0, 1, 1], [], []>} : vector<8x32xf32>, vector<32x512xf32>, vector<8x512xf32> -> vector<8x512xf32>
    %c0_3 = arith.constant 0 : index
    %c0_4 = arith.constant 0 : index
    %3 = vector.load %arg2[%c0_3, %c0_4] : memref<1x512xf32, #tpu.memory_space<vmem>>, vector<1x512xf32>
    %4 = vector.broadcast %3 : vector<1x512xf32> to vector<8x512xf32>
    %5 = arith.addf %2, %4 : vector<8x512xf32>
    %cst_5 = arith.constant 0.000000e+00 : f32
    %6 = vector.broadcast %cst_5 : f32 to vector<8x512xf32>
    %7 = arith.maximumf %5, %6 : vector<8x512xf32>
    %c0_6 = arith.constant 0 : index
    %c0_7 = arith.constant 0 : index
    %8 = vector.load %arg3[%c0_6, %c0_7] : memref<512x256xf32, #tpu.memory_space<vmem>>, vector<512x256xf32>
    %cst_8 = arith.constant dense<0.000000e+00> : vector<8x256xf32>
    %9 = tpu.matmul %7, %8, %cst_8 {dimension_numbers = #tpu.dot_dimension_numbers<[1], [0], [0], [1], [0, 0, 1, 1], [], []>} : vector<8x512xf32>, vector<512x256xf32>, vector<8x256xf32> -> vector<8x256xf32>
    %c0_9 = arith.constant 0 : index
    %c0_10 = arith.constant 0 : index
    %10 = vector.load %arg4[%c0_9, %c0_10] : memref<1x256xf32, #tpu.memory_space<vmem>>, vector<1x256xf32>
    %11 = vector.broadcast %10 : vector<1x256xf32> to vector<8x256xf32>
    %12 = arith.addf %9, %11 : vector<8x256xf32>
    %cst_11 = arith.constant 0.000000e+00 : f32
    %13 = vector.broadcast %cst_11 : f32 to vector<8x256xf32>
    %14 = arith.maximumf %12, %13 : vector<8x256xf32>
    %c0_12 = arith.constant 0 : index
    %c0_13 = arith.constant 0 : index
    %15 = vector.load %arg5[%c0_12, %c0_13] : memref<256x128xf32, #tpu.memory_space<vmem>>, vector<256x128xf32>
    %cst_14 = arith.constant dense<0.000000e+00> : vector<8x128xf32>
    %16 = tpu.matmul %14, %15, %cst_14 {dimension_numbers = #tpu.dot_dimension_numbers<[1], [0], [0], [1], [0, 0, 1, 1], [], []>} : vector<8x256xf32>, vector<256x128xf32>, vector<8x128xf32> -> vector<8x128xf32>
    %c0_15 = arith.constant 0 : index
    %c0_16 = arith.constant 0 : index
    %17 = vector.load %arg6[%c0_15, %c0_16] : memref<1x128xf32, #tpu.memory_space<vmem>>, vector<1x128xf32>
    %18 = vector.broadcast %17 : vector<1x128xf32> to vector<8x128xf32>
    %19 = arith.addf %16, %18 : vector<8x128xf32>
    %cst_17 = arith.constant 0.000000e+00 : f32
    %20 = vector.broadcast %cst_17 : f32 to vector<8x128xf32>
    %21 = arith.maximumf %19, %20 : vector<8x128xf32>
    %c0_18 = arith.constant 0 : index
    %c0_19 = arith.constant 0 : index
    %22 = vector.load %arg7[%c0_18, %c0_19] : memref<128x128xf32, #tpu.memory_space<vmem>>, vector<128x128xf32>
    %cst_20 = arith.constant dense<0.000000e+00> : vector<8x128xf32>
    %23 = tpu.matmul %21, %22, %cst_20 {dimension_numbers = #tpu.dot_dimension_numbers<[1], [0], [0], [1], [0, 0, 1, 1], [], []>} : vector<8x128xf32>, vector<128x128xf32>, vector<8x128xf32> -> vector<8x128xf32>
    %c0_21 = arith.constant 0 : index
    %c0_22 = arith.constant 0 : index
    %24 = vector.load %arg8[%c0_21, %c0_22] : memref<1x128xf32, #tpu.memory_space<vmem>>, vector<1x128xf32>
    %25 = vector.broadcast %24 : vector<1x128xf32> to vector<8x128xf32>
    %26 = arith.addf %23, %25 : vector<8x128xf32>
    %c0_23 = arith.constant 0 : index
    %c0_24 = arith.constant 0 : index
    %27 = vector.load %arg9[%c0_23, %c0_24] : memref<8x128xf32, #tpu.memory_space<vmem>>, vector<8x128xf32>
    tpu.vector_store %arg9[%c0_23, %c0_24], %26 {strides = array<i32>} : memref<8x128xf32, #tpu.memory_space<vmem>>, vector<8x128xf32>,
    return
  }
}

</mosaic_0001>

<llo_original>
// kernel: tpu_custom_call.1
$region0: #{tpu_custom_call.1}
  #allocation0 [shape = 'u32[]', space=smem, size = 0x4, offset = 0x4, fixed_abs, tag = 'smem constant byte address 0x4 - core index']
  #allocation1 [shape = 'u32[144,128]{1,0:T(1,128)}', space=vmem, size = 0x12000, scoped, tag = 'internal scratch']
  %s0 = inlined_call_operand.hbm [shape: f32[8,32], index: 0, kind: input, shape index: {}]
  %s1 = inlined_call_operand.hbm [shape: f32[32,512], index: 1, kind: input, shape index: {}]
  %s2 = inlined_call_operand.vmem [shape: f32[1,512], index: 2, kind: input, shape index: {}]
  %s3 = inlined_call_operand.hbm [shape: f32[512,256], index: 3, kind: input, shape index: {}]
  %s4 = inlined_call_operand.vmem [shape: f32[1,256], index: 4, kind: input, shape index: {}]
  %s5 = inlined_call_operand.hbm [shape: f32[256,128], index: 5, kind: input, shape index: {}]
  %s6 = inlined_call_operand.vmem [shape: f32[1,128], index: 6, kind: input, shape index: {}]
  %s7 = inlined_call_operand.hbm [shape: f32[128,128], index: 7, kind: input, shape index: {}]
  %s8 = inlined_call_operand.vmem [shape: f32[1,128], index: 8, kind: input, shape index: {}]
  %s9 = inlined_call_operand.hbm [shape: f32[8,128], index: 9, kind: output, shape index: {}]
  %s10 = sld [smem:[#allocation0]]
  $region66: #{tpu_custom_call.1} parent=0
    _
  %s12 = ssub.s32 1, %s10
  %s13 = scalar_select 0, %s12, %s10
  $region1: #{tpu_custom_call.1} parent=0
    #allocation2 [shape = 'u8[4096]{0}', space=vmem, size = 0x1000, scoped, tag = 'input window, operand 0, single buffered']
    #allocation3 [shape = 's32[1]{0}', space=sflag, size = 0x4, scoped, tag = 'scoped memory for tpu_custom_call.1']
    #allocation4 [shape = 's32[1]{0}', space=sflag, size = 0x4, scoped, tag = 'scoped memory for tpu_custom_call.1']
    #allocation5 [shape = 'u8[65536]{0}', space=vmem, size = 0x10000, scoped, tag = 'input window, operand 1, single buffered']
    #allocation6 [shape = 's32[1]{0}', space=sflag, size = 0x4, scoped, tag = 'scoped memory for tpu_custom_call.1']
    #allocation7 [shape = 'u8[524288]{0}', space=vmem, size = 0x80000, scoped, tag = 'input window, operand 3, single buffered']
    #allocation8 [shape = 'u8[131072]{0}', space=vmem, size = 0x20000, scoped, tag = 'input window, operand 5, single buffered']
    #allocation9 [shape = 's32[1]{0}', space=sflag, size = 0x4, scoped, tag = 'scoped memory for tpu_custom_call.1']
    #allocation10 [shape = 'u8[65536]{0}', space=vmem, size = 0x10000, scoped, tag = 'input window, operand 7, single buffered']
    #allocation11 [shape = 'u8[4096]{0}', space=vmem, size = 0x1000, scoped, tag = 'output window, operand 0, single buffered']
    %14 = vsyncpa [#allocation3], 0
    %15 = vsyncpa [#allocation6], 0
    %16 = vsyncpa [#allocation9], 0
    %17 = vsyncpa [#allocation4], 0
    // Predicated region
    $region2: #{tpu_custom_call.1} parent=1 // pred_check
      _
    $region3: #{tpu_custom_call.1} parent=1 // pred_check_branch
      %19 = sbr.rel (0) target = $region5
    $region4: #{tpu_custom_call.1} parent=1 // pred_region
      %s21 = ssub.s32 128, 128
      %22 = vsyncadd [#allocation3], %s21
      %s24 = sshll.u32 [#allocation2], 4
      %s25 = int_to_ptr.vmem [resolvable:$true] %s24
      %27 = dma.hbm_to_vmem [thread:$0]  %s0, 128, %s25, [#allocation3]
    $region5: #{tpu_custom_call.1} parent=1 // pred_fallthru
      _
    // Predicated region
    $region6: #{tpu_custom_call.1} parent=1 // pred_check
      _
    $region7: #{tpu_custom_call.1} parent=1 // pred_check_branch
      %29 = sbr.rel (0) target = $region9
    $region8: #{tpu_custom_call.1} parent=1 // pred_region
      %s31 = ssub.s32 2048, 2048
      %32 = vsyncadd [#allocation6], %s31
      %s33 = sshll.u32 [#allocation5], 4
      %s34 = int_to_ptr.vmem [resolvable:$true] %s33
      %39 = dma.hbm_to_vmem [thread:$0]  %s1, 2048, %s34, [#allocation6], 512, 512, 32
    $region9: #{tpu_custom_call.1} parent=1 // pred_fallthru
      _
    // Predicated region
    $region10: #{tpu_custom_call.1} parent=1 // pred_check
      _
    $region11: #{tpu_custom_call.1} parent=1 // pred_check_branch
      %41 = sbr.rel (0) target = $region13
    $region12: #{tpu_custom_call.1} parent=1 // pred_region
      _
    $region13: #{tpu_custom_call.1} parent=1 // pred_fallthru
      _
    // Predicated region
    $region14: #{tpu_custom_call.1} parent=1 // pred_check
      _
    $region15: #{tpu_custom_call.1} parent=1 // pred_check_branch
      %43 = sbr.rel (0) target = $region17
    $region16: #{tpu_custom_call.1} parent=1 // pred_region
      %s45 = ssub.s32 16384, 16384
      %46 = vsyncadd [#allocation6], %s45
      %s47 = sshll.u32 [#allocation7], 4
      %s48 = int_to_ptr.vmem [resolvable:$true] %s47
      %53 = dma.hbm_to_vmem [thread:$0]  %s3, 16384, %s48, [#allocation6], 256, 256, 16
    $region17: #{tpu_custom_call.1} parent=1 // pred_fallthru
      _
    // Predicated region
    $region18: #{tpu_custom_call.1} parent=1 // pred_check
      _
    $region19: #{tpu_custom_call.1} parent=1 // pred_check_branch
      %55 = sbr.rel (0) target = $region21
    $region20: #{tpu_custom_call.1} parent=1 // pred_region
      _
    $region21: #{tpu_custom_call.1} parent=1 // pred_fallthru
      _
    // Predicated region
    $region22: #{tpu_custom_call.1} parent=1 // pred_check
      _
    $region23: #{tpu_custom_call.1} parent=1 // pred_check_branch
      %57 = sbr.rel (0) target = $region25
    $region24: #{tpu_custom_call.1} parent=1 // pred_region
      %s59 = ssub.s32 4096, 4096
      %60 = vsyncadd [#allocation9], %s59
      %s61 = sshll.u32 [#allocation8], 4
      %s62 = int_to_ptr.vmem [resolvable:$true] %s61
      %67 = dma.hbm_to_vmem [thread:$0]  %s5, 4096, %s62, [#allocation9], 128, 128, 8
    $region25: #{tpu_custom_call.1} parent=1 // pred_fallthru
      _
    // Predicated region
    $region26: #{tpu_custom_call.1} parent=1 // pred_check
      _
    $region27: #{tpu_custom_call.1} parent=1 // pred_check_branch
      %69 = sbr.rel (0) target = $region29
    $region28: #{tpu_custom_call.1} parent=1 // pred_region
      _
    $region29: #{tpu_custom_call.1} parent=1 // pred_fallthru
      _
    // Predicated region
    $region30: #{tpu_custom_call.1} parent=1 // pred_check
      _
    $region31: #{tpu_custom_call.1} parent=1 // pred_check_branch
      %71 = sbr.rel (0) target = $region33
    $region32: #{tpu_custom_call.1} parent=1 // pred_region
      %s73 = ssub.s32 2048, 2048
      %74 = vsyncadd [#allocation9], %s73
      %s75 = sshll.u32 [#allocation10], 4
      %s76 = int_to_ptr.vmem [resolvable:$true] %s75
      %81 = dma.hbm_to_vmem [thread:$0]  %s7, 2048, %s76, [#allocation9], 128, 128, 8
    $region33: #{tpu_custom_call.1} parent=1 // pred_fallthru
      _
    // Predicated region
    $region34: #{tpu_custom_call.1} parent=1 // pred_check
      _
    $region35: #{tpu_custom_call.1} parent=1 // pred_check_branch
      %83 = sbr.rel (0) target = $region37
    $region36: #{tpu_custom_call.1} parent=1 // pred_region
      _
    $region37: #{tpu_custom_call.1} parent=1 // pred_fallthru
      _
    // Predicated region
    $region38: #{tpu_custom_call.1} parent=1 // pred_check
      _
    $region39: #{tpu_custom_call.1} parent=1 // pred_check_branch
      %85 = sbr.rel (0) target = $region41
    $region40: #{tpu_custom_call.1} parent=1 // pred_region
      %86 = dma.done [#allocation3], 128
    $region41: #{tpu_custom_call.1} parent=1 // pred_fallthru
      _
    // Predicated region
    $region42: #{tpu_custom_call.1} parent=1 // pred_check
      _
    $region43: #{tpu_custom_call.1} parent=1 // pred_check_branch
      %88 = sbr.rel (0) target = $region45
    $region44: #{tpu_custom_call.1} parent=1 // pred_region
      %89 = dma.done [#allocation6], 2048
    $region45: #{tpu_custom_call.1} parent=1 // pred_fallthru
      _
    // Predicated region
    $region46: #{tpu_custom_call.1} parent=1 // pred_check
      _
    $region47: #{tpu_custom_call.1} parent=1 // pred_check_branch
      %91 = sbr.rel (0) target = $region49
    $region48: #{tpu_custom_call.1} parent=1 // pred_region
      %92 = dma.done [#allocation6], 16384
    $region49: #{tpu_custom_call.1} parent=1 // pred_fallthru
      _
    // Predicated region
    $region50: #{tpu_custom_call.1} parent=1 // pred_check
      _
    $region51: #{tpu_custom_call.1} parent=1 // pred_check_branch
      %94 = sbr.rel (0) target = $region53
    $region52: #{tpu_custom_call.1} parent=1 // pred_region
      %95 = dma.done [#allocation9], 4096
    $region53: #{tpu_custom_call.1} parent=1 // pred_fallthru
      _
    // Predicated region
    $region54: #{tpu_custom_call.1} parent=1 // pred_check
      _
    $region55: #{tpu_custom_call.1} parent=1 // pred_check_branch
      %97 = sbr.rel (0) target = $region57
    $region56: #{tpu_custom_call.1} parent=1 // pred_region
      %98 = dma.done [#allocation9], 2048
    $region57: #{tpu_custom_call.1} parent=1 // pred_fallthru
      _
    %v99 = vld [vmem:[#allocation2] sm:$0xff]
    %v100 = vld [vmem:[#allocation5] sm:$0xff]
    %v101 = vld [vmem:[#allocation5 + $0x8] sm:$0xff]
    %v102 = vld [vmem:[#allocation5 + $0x10] sm:$0xff]
    %v103 = vld [vmem:[#allocation5 + $0x18] sm:$0xff]
    %v104 = vld [vmem:[#allocation5 + $0x20] sm:$0xff]
    %v105 = vld [vmem:[#allocation5 + $0x28] sm:$0xff]
    %v106 = vld [vmem:[#allocation5 + $0x30] sm:$0xff]
    %v107 = vld [vmem:[#allocation5 + $0x38] sm:$0xff]
    %v108 = vld [vmem:[#allocation5 + $0x40] sm:$0xff]
    %v109 = vld [vmem:[#allocation5 + $0x48] sm:$0xff]
    %v110 = vld [vmem:[#allocation5 + $0x50] sm:$0xff]
    %v111 = vld [vmem:[#allocation5 + $0x58] sm:$0xff]
    %v112 = vld [vmem:[#allocation5 + $0x60] sm:$0xff]
    %v113 = vld [vmem:[#allocation5 + $0x68] sm:$0xff]
    %v114 = vld [vmem:[#allocation5 + $0x70] sm:$0xff]
    %v115 = vld [vmem:[#allocation5 + $0x78] sm:$0xff]
    %v116 = vld [vmem:[%s2] sm:$0xf]
    %v118 = vlaneseq
    %v119 = vshrl.u32 %v118, 7
    %v120 = vsub.s32 0, %v119
    %v121 = vrot.slane %v116, %v120
    %v122 = vlaneseq
    %v123 = vshrl.u32 %v122, 7
    %v124 = vsub.s32 1, %v123
    %v125 = vrot.slane %v116, %v124
    %v126 = vlaneseq
    %v127 = vshrl.u32 %v126, 7
    %v128 = vsub.s32 2, %v127
    %v129 = vrot.slane %v116, %v128
    %v130 = vlaneseq
    %v131 = vshrl.u32 %v130, 7
    %v132 = vsub.s32 3, %v131
    %v133 = vrot.slane %v116, %v132
    %vm138 = vcmask 261120
    %v140 = vsel %vm138, %v99, 0
    %142 = vmatprep.subr.mxu0 %v101
    %143 = vmatpush1.msra.mxu0 %v100
    %144 = vmatprep.subr.mxu0 %v105
    %145 = vmatpush1.msra.mxu0 %v104
    %146 = vmatprep.subr.mxu0 %v109
    %147 = vmatpush1.msra.mxu0 %v108
    %148 = vmatprep.subr.mxu0 %v113
    %149 = vmatpush1.msra.mxu0 %v112
    %150 = vmatprep.subr.mxu0 0.0
    %151 = vmatpush1.msra.mxu0 0.0
    %152 = vmatprep.subr.mxu0 0.0
    %153 = vmatpush1.msra.mxu0 0.0
    %154 = vmatprep.subr.mxu0 0.0
    %155 = vmatpush1.msra.mxu0 0.0
    %156 = vmatprep.subr.mxu0 0.0
    %157 = vmatpush1.msra.mxu0 0.0
    %158 = vmatprep.subr.mxu0 0.0
    %159 = vmatpush1.msra.mxu0 0.0
    %160 = vmatprep.subr.mxu0 0.0
    %161 = vmatpush1.msra.mxu0 0.0
    %162 = vmatprep.subr.mxu0 0.0
    %163 = vmatpush1.msra.mxu0 0.0
    %164 = vmatprep.subr.mxu0 0.0
    %165 = vmatpush1.msra.mxu0 0.0
    %166 = vmatprep.subr.mxu0 0.0
    %167 = vmatpush1.msra.mxu0 0.0
    %168 = vmatprep.subr.mxu0 0.0
    %169 = vmatpush1.msra.mxu0 0.0
    %170 = vmatprep.subr.mxu0 0.0
    %171 = vmatpush1.msra.mxu0 0.0
    %172 = vmatprep.subr.mxu0 0.0
    %173 = vmatpush1.msra.mxu0 0.0
    %174 = vmatprep.subr.mxu0 0.0
    %175 = vmatpush1.msra.mxu0 0.0
    %176 = vmatprep.subr.mxu0 0.0
    %177 = vmatpush1.msra.mxu0 0.0
    %178 = vmatprep.subr.mxu0 0.0
    %179 = vmatpush1.msra.mxu0 0.0
    %180 = vmatprep.subr.mxu0 0.0
    %181 = vmatpush1.msra.mxu0 0.0
    %182 = vmatprep.subr.mxu0 0.0
    %183 = vmatpush1.msra.mxu0 0.0
    %184 = vmatprep.subr.mxu0 0.0
    %185 = vmatpush1.msra.mxu0 0.0
    %186 = vmatprep.subr.mxu0 0.0
    %187 = vmatpush1.msra.mxu0 0.0
    %188 = vmatprep.subr.mxu0 0.0
    %189 = vmatpush1.msra.mxu0 0.0
    %190 = vmatprep.subr.mxu0 0.0
    %191 = vmatpush1.msra.mxu0 0.0
    %192 = vmatprep.subr.mxu0 0.0
    %193 = vmatpush1.msra.mxu0 0.0
    %194 = vmatprep.subr.mxu0 0.0
    %195 = vmatpush1.msra.mxu0 0.0
    %196 = vmatprep.subr.mxu0 0.0
    %197 = vmatpush1.msra.mxu0 0.0
    %198 = vmatprep.subr.mxu0 0.0
    %199 = vmatpush1.msra.mxu0 0.0
    %200 = vmatprep.subr.mxu0 0.0
    %201 = vmatpush1.msra.mxu0 0.0
    %202 = vmatprep.subr.mxu0 0.0
    %203 = vmatpush1.msra.mxu0 0.0
    %204 = vmatprep.subr.mxu0 0.0
    %205 = vmatpush1.msra.mxu0 0.0
    %206 = vmatprep.mubr.f32.mxu0 0.0
    %207 = vmatmul.mubr.f32.gmra.mrb[0].mxu0 %v140
    %v208 = vpop.f32.mrb[0].mxu0
    %v209 = vadd.f32 %v121, %v208
    %v210 = vpop.f32.mrb[0].mxu0
    %v211 = vadd.f32 %v125, %v210
    %212 = vdwg.mxu0
    %213 = vmatprep.subr.mxu0 %v103
    %214 = vmatpush1.msra.mxu0 %v102
    %215 = vmatprep.subr.mxu0 %v107
    %216 = vmatpush1.msra.mxu0 %v106
    %217 = vmatprep.subr.mxu0 %v111
    %218 = vmatpush1.msra.mxu0 %v110
    %219 = vmatprep.subr.mxu0 %v115
    %220 = vmatpush1.msra.mxu0 %v114
    %221 = vmatprep.subr.mxu0 0.0
    %222 = vmatpush1.msra.mxu0 0.0
    %223 = vmatprep.subr.mxu0 0.0
    %224 = vmatpush1.msra.mxu0 0.0
    %225 = vmatprep.subr.mxu0 0.0
    %226 = vmatpush1.msra.mxu0 0.0
    %227 = vmatprep.subr.mxu0 0.0
    %228 = vmatpush1.msra.mxu0 0.0
    %229 = vmatprep.subr.mxu0 0.0
    %230 = vmatpush1.msra.mxu0 0.0
    %231 = vmatprep.subr.mxu0 0.0
    %232 = vmatpush1.msra.mxu0 0.0
    %233 = vmatprep.subr.mxu0 0.0
    %234 = vmatpush1.msra.mxu0 0.0
    %235 = vmatprep.subr.mxu0 0.0
    %236 = vmatpush1.msra.mxu0 0.0
    %237 = vmatprep.subr.mxu0 0.0
    %238 = vmatpush1.msra.mxu0 0.0
    %239 = vmatprep.subr.mxu0 0.0
    %240 = vmatpush1.msra.mxu0 0.0
    %241 = vmatprep.subr.mxu0 0.0
    %242 = vmatpush1.msra.mxu0 0.0
    %243 = vmatprep.subr.mxu0 0.0
    %244 = vmatpush1.msra.mxu0 0.0
    %245 = vmatprep.subr.mxu0 0.0
    %246 = vmatpush1.msra.mxu0 0.0
    %247 = vmatprep.subr.mxu0 0.0
    %248 = vmatpush1.msra.mxu0 0.0
    %249 = vmatprep.subr.mxu0 0.0
    %250 = vmatpush1.msra.mxu0 0.0
    %251 = vmatprep.subr.mxu0 0.0
    %252 = vmatpush1.msra.mxu0 0.0
    %253 = vmatprep.subr.mxu0 0.0
    %254 = vmatpush1.msra.mxu0 0.0
    %255 = vmatprep.subr.mxu0 0.0
    %256 = vmatpush1.msra.mxu0 0.0
    %257 = vmatprep.subr.mxu0 0.0
    %258 = vmatpush1.msra.mxu0 0.0
    %259 = vmatprep.subr.mxu0 0.0
    %260 = vmatpush1.msra.mxu0 0.0
    %261 = vmatprep.subr.mxu0 0.0
    %262 = vmatpush1.msra.mxu0 0.0
    %263 = vmatprep.subr.mxu0 0.0
    %264 = vmatpush1.msra.mxu0 0.0
    %265 = vmatprep.subr.mxu0 0.0
    %266 = vmatpush1.msra.mxu0 0.0
    %267 = vmatprep.subr.mxu0 0.0
    %268 = vmatpush1.msra.mxu0 0.0
    %269 = vmatprep.subr.mxu0 0.0
    %270 = vmatpush1.msra.mxu0 0.0
    %271 = vmatprep.subr.mxu0 0.0
    %272 = vmatpush1.msra.mxu0 0.0
    %273 = vmatprep.subr.mxu0 0.0
    %274 = vmatpush1.msra.mxu0 0.0
    %275 = vmatprep.subr.mxu0 0.0
    %276 = vmatpush1.msra.mxu0 0.0
    %277 = vmatprep.mubr.f32.mxu0 0.0
    %278 = vmatmul.mubr.f32.gmra.mrb[0].mxu0 %v140
    %v279 = vpop.f32.mrb[0].mxu0
    %v280 = vadd.f32 %v129, %v279
    %v281 = vpop.f32.mrb[0].mxu0
    %v282 = vadd.f32 %v133, %v281
    %283 = vdwg.mxu0
    %v284 = vmax.f32 %v209, 0.0
    %v285 = vmax.f32 %v211, 0.0
    %v286 = vmax.f32 %v280, 0.0
    %v287 = vmax.f32 %v282, 0.0
    %v288 = vld [vmem:[#allocation7] sm:$0xff]
    %v289 = vld [vmem:[#allocation7 + $0x8] sm:$0xff]
    %v290 = vld [vmem:[#allocation7 + $0x10] sm:$0xff]
    %v291 = vld [vmem:[#allocation7 + $0x18] sm:$0xff]
    %v292 = vld [vmem:[#allocation7 + $0x20] sm:$0xff]
    %v293 = vld [vmem:[#allocation7 + $0x28] sm:$0xff]
    %v294 = vld [vmem:[#allocation7 + $0x30] sm:$0xff]
    %v295 = vld [vmem:[#allocation7 + $0x38] sm:$0xff]
    %v296 = vld [vmem:[#allocation7 + $0x40] sm:$0xff]
    %v297 = vld [vmem:[#allocation7 + $0x48] sm:$0xff]
    %v298 = vld [vmem:[#allocation7 + $0x50] sm:$0xff]
    %v299 = vld [vmem:[#allocation7 + $0x58] sm:$0xff]
    %v300 = vld [vmem:[#allocation7 + $0x60] sm:$0xff]
    %v301 = vld [vmem:[#allocation7 + $0x68] sm:$0xff]
    %v302 = vld [vmem:[#allocation7 + $0x70] sm:$0xff]
    %v303 = vld [vmem:[#allocation7 + $0x78] sm:$0xff]
    %v304 = vld [vmem:[#allocation7 + $0x80] sm:$0xff]
    %v305 = vld [vmem:[#allocation7 + $0x88] sm:$0xff]
    %v306 = vld [vmem:[#allocation7 + $0x90] sm:$0xff]
    %v307 = vld [vmem:[#allocation7 + $0x98] sm:$0xff]
    %v308 = vld [vmem:[#allocation7 + $0xa0] sm:$0xff]
    %v309 = vld [vmem:[#allocation7 + $0xa8] sm:$0xff]
    %v310 = vld [vmem:[#allocation7 + $0xb0] sm:$0xff]
    %v311 = vld [vmem:[#allocation7 + $0xb8] sm:$0xff]
    %v312 = vld [vmem:[#allocation7 + $0xc0] sm:$0xff]
    %v313 = vld [vmem:[#allocation7 + $0xc8] sm:$0xff]
    %v314 = vld [vmem:[#allocation7 + $0xd0] sm:$0xff]
    %v315 = vld [vmem:[#allocation7 + $0xd8] sm:$0xff]
    %v316 = vld [vmem:[#allocation7 + $0xe0] sm:$0xff]
    %v317 = vld [vmem:[#allocation7 + $0xe8] sm:$0xff]
    %v318 = vld [vmem:[#allocation7 + $0xf0] sm:$0xff]
    %v319 = vld [vmem:[#allocation7 + $0xf8] sm:$0xff]
    %v320 = vld [vmem:[#allocation7 + $0x100] sm:$0xff]
    %v321 = vld [vmem:[#allocation7 + $0x108] sm:$0xff]
    %v322 = vld [vmem:[#allocation7 + $0x110] sm:$0xff]
    %v323 = vld [vmem:[#allocation7 + $0x118] sm:$0xff]
    %v324 = vld [vmem:[#allocation7 + $0x120] sm:$0xff]
    %v325 = vld [vmem:[#allocation7 + $0x128] sm:$0xff]
    %v326 = vld [vmem:[#allocation7 + $0x130] sm:$0xff]
    %v327 = vld [vmem:[#allocation7 + $0x138] sm:$0xff]
    %v328 = vld [vmem:[#allocation7 + $0x140] sm:$0xff]
    %v329 = vld [vmem:[#allocation7 + $0x148] sm:$0xff]
    %v330 = vld [vmem:[#allocation7 + $0x150] sm:$0xff]
    %v331 = vld [vmem:[#allocation7 + $0x158] sm:$0xff]
    %v332 = vld [vmem:[#allocation7 + $0x160] sm:$0xff]
    %v333 = vld [vmem:[#allocation7 + $0x168] sm:$0xff]
    %v334 = vld [vmem:[#allocation7 + $0x170] sm:$0xff]
    %v335 = vld [vmem:[#allocation7 + $0x178] sm:$0xff]
    %v336 = vld [vmem:[#allocation7 + $0x180] sm:$0xff]
    %v337 = vld [vmem:[#allocation7 + $0x188] sm:$0xff]
    %v338 = vld [vmem:[#allocation7 + $0x190] sm:$0xff]
    %v339 = vld [vmem:[#allocation7 + $0x198] sm:$0xff]
    %v340 = vld [vmem:[#allocation7 + $0x1a0] sm:$0xff]
    %v341 = vld [vmem:[#allocation7 + $0x1a8] sm:$0xff]
    %v342 = vld [vmem:[#allocation7 + $0x1b0] sm:$0xff]
    %v343 = vld [vmem:[#allocation7 + $0x1b8] sm:$0xff]
    %v344 = vld [vmem:[#allocation7 + $0x1c0] sm:$0xff]
    %v345 = vld [vmem:[#allocation7 + $0x1c8] sm:$0xff]
    %v346 = vld [vmem:[#allocation7 + $0x1d0] sm:$0xff]
    %v347 = vld [vmem:[#allocation7 + $0x1d8] sm:$0xff]
    %v348 = vld [vmem:[#allocation7 + $0x1e0] sm:$0xff]
    %v349 = vld [vmem:[#allocation7 + $0x1e8] sm:$0xff]
    %v350 = vld [vmem:[#allocation7 + $0x1f0] sm:$0xff]
    %v351 = vld [vmem:[#allocation7 + $0x1f8] sm:$0xff]
    %v352 = vld [vmem:[#allocation7 + $0x200] sm:$0xff]
    %v353 = vld [vmem:[#allocation7 + $0x208] sm:$0xff]
    %v354 = vld [vmem:[#allocation7 + $0x210] sm:$0xff]
    %v355 = vld [vmem:[#allocation7 + $0x218] sm:$0xff]
    %v356 = vld [vmem:[#allocation7 + $0x220] sm:$0xff]
    %v357 = vld [vmem:[#allocation7 + $0x228] sm:$0xff]
    %v358 = vld [vmem:[#allocation7 + $0x230] sm:$0xff]
    %v359 = vld [vmem:[#allocation7 + $0x238] sm:$0xff]
    %v360 = vld [vmem:[#allocation7 + $0x240] sm:$0xff]
    %v361 = vld [vmem:[#allocation7 + $0x248] sm:$0xff]
    %v362 = vld [vmem:[#allocation7 + $0x250] sm:$0xff]
    %v363 = vld [vmem:[#allocation7 + $0x258] sm:$0xff]
    %v364 = vld [vmem:[#allocation7 + $0x260] sm:$0xff]
    %v365 = vld [vmem:[#allocation7 + $0x268] sm:$0xff]
    %v366 = vld [vmem:[#allocation7 + $0x270] sm:$0xff]
    %v367 = vld [vmem:[#allocation7 + $0x278] sm:$0xff]
    %v368 = vld [vmem:[#allocation7 + $0x280] sm:$0xff]
    %v369 = vld [vmem:[#allocation7 + $0x288] sm:$0xff]
    %v370 = vld [vmem:[#allocation7 + $0x290] sm:$0xff]
    %v371 = vld [vmem:[#allocation7 + $0x298] sm:$0xff]
    %v372 = vld [vmem:[#allocation7 + $0x2a0] sm:$0xff]
    %v373 = vld [vmem:[#allocation7 + $0x2a8] sm:$0xff]
    %v374 = vld [vmem:[#allocation7 + $0x2b0] sm:$0xff]
    %v375 = vld [vmem:[#allocation7 + $0x2b8] sm:$0xff]
    %v376 = vld [vmem:[#allocation7 + $0x2c0] sm:$0xff]
    %v377 = vld [vmem:[#allocation7 + $0x2c8] sm:$0xff]
    %v378 = vld [vmem:[#allocation7 + $0x2d0] sm:$0xff]
    %v379 = vld [vmem:[#allocation7 + $0x2d8] sm:$0xff]
    %v380 = vld [vmem:[#allocation7 + $0x2e0] sm:$0xff]
    %v381 = vld [vmem:[#allocation7 + $0x2e8] sm:$0xff]
    %v382 = vld [vmem:[#allocation7 + $0x2f0] sm:$0xff]
    %v383 = vld [vmem:[#allocation7 + $0x2f8] sm:$0xff]
    %v384 = vld [vmem:[#allocation7 + $0x300] sm:$0xff]
    %v385 = vld [vmem:[#allocation7 + $0x308] sm:$0xff]
    %v386 = vld [vmem:[#allocation7 + $0x310] sm:$0xff]
    %v387 = vld [vmem:[#allocation7 + $0x318] sm:$0xff]
    %v388 = vld [vmem:[#allocation7 + $0x320] sm:$0xff]
    %v389 = vld [vmem:[#allocation7 + $0x328] sm:$0xff]
    %v390 = vld [vmem:[#allocation7 + $0x330] sm:$0xff]
    %v391 = vld [vmem:[#allocation7 + $0x338] sm:$0xff]
    %v392 = vld [vmem:[#allocation7 + $0x340] sm:$0xff]
    %v393 = vld [vmem:[#allocation7 + $0x348] sm:$0xff]
    %v394 = vld [vmem:[#allocation7 + $0x350] sm:$0xff]
    %v395 = vld [vmem:[#allocation7 + $0x358] sm:$0xff]
    %v396 = vld [vmem:[#allocation7 + $0x360] sm:$0xff]
    %v397 = vld [vmem:[#allocation7 + $0x368] sm:$0xff]
    %v398 = vld [vmem:[#allocation7 + $0x370] sm:$0xff]
    %v399 = vld [vmem:[#allocation7 + $0x378] sm:$0xff]
    %v400 = vld [vmem:[#allocation7 + $0x380] sm:$0xff]
    %v401 = vld [vmem:[#allocation7 + $0x388] sm:$0xff]
    %v402 = vld [vmem:[#allocation7 + $0x390] sm:$0xff]
    %v403 = vld [vmem:[#allocation7 + $0x398] sm:$0xff]
    %v404 = vld [vmem:[#allocation7 + $0x3a0] sm:$0xff]
    %v405 = vld [vmem:[#allocation7 + $0x3a8] sm:$0xff]
    %v406 = vld [vmem:[#allocation7 + $0x3b0] sm:$0xff]
    %v407 = vld [vmem:[#allocation7 + $0x3b8] sm:$0xff]
    %v408 = vld [vmem:[#allocation7 + $0x3c0] sm:$0xff]
    %v409 = vld [vmem:[#allocation7 + $0x3c8] sm:$0xff]
    %v410 = vld [vmem:[#allocation7 + $0x3d0] sm:$0xff]
    %v411 = vld [vmem:[#allocation7 + $0x3d8] sm:$0xff]
    %v412 = vld [vmem:[#allocation7 + $0x3e0] sm:$0xff]
    %v413 = vld [vmem:[#allocation7 + $0x3e8] sm:$0xff]
    %v414 = vld [vmem:[#allocation7 + $0x3f0] sm:$0xff]
    %v415 = vld [vmem:[#allocation7 + $0x3f8] sm:$0xff]
    %v416 = vld [vmem:[%s4] sm:$0x3]
    %v418 = vlaneseq
    %v419 = vshrl.u32 %v418, 7
    %v420 = vsub.s32 0, %v419
    %v421 = vrot.slane %v416, %v420
    %v422 = vlaneseq
    %v423 = vshrl.u32 %v422, 7
    %v424 = vsub.s32 1, %v423
    %v425 = vrot.slane %v416, %v424
    %428 = vmatprep.subr.mxu0 %v289
    %429 = vmatpush1.msra.mxu0 %v288
    %430 = vmatprep.subr.mxu0 %v291
    %431 = vmatpush1.msra.mxu0 %v290
    %432 = vmatprep.subr.mxu0 %v293
    %433 = vmatpush1.msra.mxu0 %v292
    %434 = vmatprep.subr.mxu0 %v295
    %435 = vmatpush1.msra.mxu0 %v294
    %436 = vmatprep.subr.mxu0 %v297
    %437 = vmatpush1.msra.mxu0 %v296
    %438 = vmatprep.subr.mxu0 %v299
    %439 = vmatpush1.msra.mxu0 %v298
    %440 = vmatprep.subr.mxu0 %v301
    %441 = vmatpush1.msra.mxu0 %v300
    %442 = vmatprep.subr.mxu0 %v303
    %443 = vmatpush1.msra.mxu0 %v302
    %444 = vmatprep.subr.mxu0 %v305
    %445 = vmatpush1.msra.mxu0 %v304
    %446 = vmatprep.subr.mxu0 %v307
    %447 = vmatpush1.msra.mxu0 %v306
    %448 = vmatprep.subr.mxu0 %v309
    %449 = vmatpush1.msra.mxu0 %v308
    %450 = vmatprep.subr.mxu0 %v311
    %451 = vmatpush1.msra.mxu0 %v310
    %452 = vmatprep.subr.mxu0 %v313
    %453 = vmatpush1.msra.mxu0 %v312
    %454 = vmatprep.subr.mxu0 %v315
    %455 = vmatpush1.msra.mxu0 %v314
    %456 = vmatprep.subr.mxu0 %v317
    %457 = vmatpush1.msra.mxu0 %v316
    %458 = vmatprep.subr.mxu0 %v319
    %459 = vmatpush1.msra.mxu0 %v318
    %460 = vmatprep.subr.mxu0 %v321
    %461 = vmatpush1.msra.mxu0 %v320
    %462 = vmatprep.subr.mxu0 %v323
    %463 = vmatpush1.msra.mxu0 %v322
    %464 = vmatprep.subr.mxu0 %v325
    %465 = vmatpush1.msra.mxu0 %v324
    %466 = vmatprep.subr.mxu0 %v327
    %467 = vmatpush1.msra.mxu0 %v326
    %468 = vmatprep.subr.mxu0 %v329
    %469 = vmatpush1.msra.mxu0 %v328
    %470 = vmatprep.subr.mxu0 %v331
    %471 = vmatpush1.msra.mxu0 %v330
    %472 = vmatprep.subr.mxu0 %v333
    %473 = vmatpush1.msra.mxu0 %v332
    %474 = vmatprep.subr.mxu0 %v335
    %475 = vmatpush1.msra.mxu0 %v334
    %476 = vmatprep.subr.mxu0 %v337
    %477 = vmatpush1.msra.mxu0 %v336
    %478 = vmatprep.subr.mxu0 %v339
    %479 = vmatpush1.msra.mxu0 %v338
    %480 = vmatprep.subr.mxu0 %v341
    %481 = vmatpush1.msra.mxu0 %v340
    %482 = vmatprep.subr.mxu0 %v343
    %483 = vmatpush1.msra.mxu0 %v342
    %484 = vmatprep.subr.mxu0 %v345
    %485 = vmatpush1.msra.mxu0 %v344
    %486 = vmatprep.subr.mxu0 %v347
    %487 = vmatpush1.msra.mxu0 %v346
    %488 = vmatprep.subr.mxu0 %v349
    %489 = vmatpush1.msra.mxu0 %v348
    %490 = vmatprep.subr.mxu0 %v351
    %491 = vmatpush1.msra.mxu0 %v350
    %492 = vmatprep.mubr.f32.mxu0 %v285
    %493 = vmatmul.mubr.f32.gmra.mrb[0].mxu0 %v284
    %v494 = vpop.f32.mrb[0].mxu0
    %v495 = vadd.f32 %v421, %v494
    %v496 = vpop.f32.mrb[0].mxu0
    %v497 = vadd.f32 %v425, %v496
    %498 = vdwg.mxu0
    %499 = vmatprep.subr.mxu0 %v353
    %500 = vmatpush1.msra.mxu0 %v352
    %501 = vmatprep.subr.mxu0 %v355
    %502 = vmatpush1.msra.mxu0 %v354
    %503 = vmatprep.subr.mxu0 %v357
    %504 = vmatpush1.msra.mxu0 %v356
    %505 = vmatprep.subr.mxu0 %v359
    %506 = vmatpush1.msra.mxu0 %v358
    %507 = vmatprep.subr.mxu0 %v361
    %508 = vmatpush1.msra.mxu0 %v360
    %509 = vmatprep.subr.mxu0 %v363
    %510 = vmatpush1.msra.mxu0 %v362
    %511 = vmatprep.subr.mxu0 %v365
    %512 = vmatpush1.msra.mxu0 %v364
    %513 = vmatprep.subr.mxu0 %v367
    %514 = vmatpush1.msra.mxu0 %v366
    %515 = vmatprep.subr.mxu0 %v369
    %516 = vmatpush1.msra.mxu0 %v368
    %517 = vmatprep.subr.mxu0 %v371
    %518 = vmatpush1.msra.mxu0 %v370
    %519 = vmatprep.subr.mxu0 %v373
    %520 = vmatpush1.msra.mxu0 %v372
    %521 = vmatprep.subr.mxu0 %v375
    %522 = vmatpush1.msra.mxu0 %v374
    %523 = vmatprep.subr.mxu0 %v377
    %524 = vmatpush1.msra.mxu0 %v376
    %525 = vmatprep.subr.mxu0 %v379
    %526 = vmatpush1.msra.mxu0 %v378
    %527 = vmatprep.subr.mxu0 %v381
    %528 = vmatpush1.msra.mxu0 %v380
    %529 = vmatprep.subr.mxu0 %v383
    %530 = vmatpush1.msra.mxu0 %v382
    %531 = vmatprep.subr.mxu0 %v385
    %532 = vmatpush1.msra.mxu0 %v384
    %533 = vmatprep.subr.mxu0 %v387
    %534 = vmatpush1.msra.mxu0 %v386
    %535 = vmatprep.subr.mxu0 %v389
    %536 = vmatpush1.msra.mxu0 %v388
    %537 = vmatprep.subr.mxu0 %v391
    %538 = vmatpush1.msra.mxu0 %v390
    %539 = vmatprep.subr.mxu0 %v393
    %540 = vmatpush1.msra.mxu0 %v392
    %541 = vmatprep.subr.mxu0 %v395
    %542 = vmatpush1.msra.mxu0 %v394
    %543 = vmatprep.subr.mxu0 %v397
    %544 = vmatpush1.msra.mxu0 %v396
    %545 = vmatprep.subr.mxu0 %v399
    %546 = vmatpush1.msra.mxu0 %v398
    %547 = vmatprep.subr.mxu0 %v401
    %548 = vmatpush1.msra.mxu0 %v400
    %549 = vmatprep.subr.mxu0 %v403
    %550 = vmatpush1.msra.mxu0 %v402
    %551 = vmatprep.subr.mxu0 %v405
    %552 = vmatpush1.msra.mxu0 %v404
    %553 = vmatprep.subr.mxu0 %v407
    %554 = vmatpush1.msra.mxu0 %v406
    %555 = vmatprep.subr.mxu0 %v409
    %556 = vmatpush1.msra.mxu0 %v408
    %557 = vmatprep.subr.mxu0 %v411
    %558 = vmatpush1.msra.mxu0 %v410
    %559 = vmatprep.subr.mxu0 %v413
    %560 = vmatpush1.msra.mxu0 %v412
    %561 = vmatprep.subr.mxu0 %v415
    %562 = vmatpush1.msra.mxu0 %v414
    %563 = vmatprep.mubr.f32.mxu0 %v287
    %564 = vmatmul.mubr.f32.gmra.mrb[0].mxu0 %v286
    %v565 = vpop.f32.mrb[0].mxu0
    %v566 = vadd.f32 %v495, %v565
    %v567 = vpop.f32.mrb[0].mxu0
    %v568 = vadd.f32 %v497, %v567
    %569 = vdwg.mxu0
    %v570 = vmax.f32 %v566, 0.0
    %v571 = vmax.f32 %v568, 0.0
    %v572 = vld [vmem:[#allocation8] sm:$0xff]
    %v573 = vld [vmem:[#allocation8 + $0x8] sm:$0xff]
    %v574 = vld [vmem:[#allocation8 + $0x10] sm:$0xff]
    %v575 = vld [vmem:[#allocation8 + $0x18] sm:$0xff]
    %v576 = vld [vmem:[#allocation8 + $0x20] sm:$0xff]
    %v577 = vld [vmem:[#allocation8 + $0x28] sm:$0xff]
    %v578 = vld [vmem:[#allocation8 + $0x30] sm:$0xff]
    %v579 = vld [vmem:[#allocation8 + $0x38] sm:$0xff]
    %v580 = vld [vmem:[#allocation8 + $0x40] sm:$0xff]
    %v581 = vld [vmem:[#allocation8 + $0x48] sm:$0xff]
    %v582 = vld [vmem:[#allocation8 + $0x50] sm:$0xff]
    %v583 = vld [vmem:[#allocation8 + $0x58] sm:$0xff]
    %v584 = vld [vmem:[#allocation8 + $0x60] sm:$0xff]
    %v585 = vld [vmem:[#allocation8 + $0x68] sm:$0xff]
    %v586 = vld [vmem:[#allocation8 + $0x70] sm:$0xff]
    %v587 = vld [vmem:[#allocation8 + $0x78] sm:$0xff]
    %v588 = vld [vmem:[#allocation8 + $0x80] sm:$0xff]
    %v589 = vld [vmem:[#allocation8 + $0x88] sm:$0xff]
    %v590 = vld [vmem:[#allocation8 + $0x90] sm:$0xff]
    %v591 = vld [vmem:[#allocation8 + $0x98] sm:$0xff]
    %v592 = vld [vmem:[#allocation8 + $0xa0] sm:$0xff]
    %v593 = vld [vmem:[#allocation8 + $0xa8] sm:$0xff]
    %v594 = vld [vmem:[#allocation8 + $0xb0] sm:$0xff]
    %v595 = vld [vmem:[#allocation8 + $0xb8] sm:$0xff]
    %v596 = vld [vmem:[#allocation8 + $0xc0] sm:$0xff]
    %v597 = vld [vmem:[#allocation8 + $0xc8] sm:$0xff]
    %v598 = vld [vmem:[#allocation8 + $0xd0] sm:$0xff]
    %v599 = vld [vmem:[#allocation8 + $0xd8] sm:$0xff]
    %v600 = vld [vmem:[#allocation8 + $0xe0] sm:$0xff]
    %v601 = vld [vmem:[#allocation8 + $0xe8] sm:$0xff]
    %v602 = vld [vmem:[#allocation8 + $0xf0] sm:$0xff]
    %v603 = vld [vmem:[#allocation8 + $0xf8] sm:$0xff]
    %v604 = vld [vmem:[%s6] sm:$0x1]
    %v606 = vlaneseq
    %v607 = vshrl.u32 %v606, 7
    %v608 = vsub.s32 0, %v607
    %v609 = vrot.slane %v604, %v608
    %611 = vmatprep.subr.mxu0 0.0
    %612 = vmatpush1.msra.mxu0 %v572
    %613 = vmatprep.subr.mxu0 0.0
    %614 = vmatpush1.msra.mxu0 %v573
    %615 = vmatprep.subr.mxu0 0.0
    %616 = vmatpush1.msra.mxu0 %v574
    %617 = vmatprep.subr.mxu0 0.0
    %618 = vmatpush1.msra.mxu0 %v575
    %619 = vmatprep.subr.mxu0 0.0
    %620 = vmatpush1.msra.mxu0 %v576
    %621 = vmatprep.subr.mxu0 0.0
    %622 = vmatpush1.msra.mxu0 %v577
    %623 = vmatprep.subr.mxu0 0.0
    %624 = vmatpush1.msra.mxu0 %v578
    %625 = vmatprep.subr.mxu0 0.0
    %626 = vmatpush1.msra.mxu0 %v579
    %627 = vmatprep.subr.mxu0 0.0
    %628 = vmatpush1.msra.mxu0 %v580
    %629 = vmatprep.subr.mxu0 0.0
    %630 = vmatpush1.msra.mxu0 %v581
    %631 = vmatprep.subr.mxu0 0.0
    %632 = vmatpush1.msra.mxu0 %v582
    %633 = vmatprep.subr.mxu0 0.0
    %634 = vmatpush1.msra.mxu0 %v583
    %635 = vmatprep.subr.mxu0 0.0
    %636 = vmatpush1.msra.mxu0 %v584
    %637 = vmatprep.subr.mxu0 0.0
    %638 = vmatpush1.msra.mxu0 %v585
    %639 = vmatprep.subr.mxu0 0.0
    %640 = vmatpush1.msra.mxu0 %v586
    %641 = vmatprep.subr.mxu0 0.0
    %642 = vmatpush1.msra.mxu0 %v587
    %643 = vmatprep.subr.mxu0 0.0
    %644 = vmatpush1.msra.mxu0 %v588
    %645 = vmatprep.subr.mxu0 0.0
    %646 = vmatpush1.msra.mxu0 %v589
    %647 = vmatprep.subr.mxu0 0.0
    %648 = vmatpush1.msra.mxu0 %v590
    %649 = vmatprep.subr.mxu0 0.0
    %650 = vmatpush1.msra.mxu0 %v591
    %651 = vmatprep.subr.mxu0 0.0
    %652 = vmatpush1.msra.mxu0 %v592
    %653 = vmatprep.subr.mxu0 0.0
    %654 = vmatpush1.msra.mxu0 %v593
    %655 = vmatprep.subr.mxu0 0.0
    %656 = vmatpush1.msra.mxu0 %v594
    %657 = vmatprep.subr.mxu0 0.0
    %658 = vmatpush1.msra.mxu0 %v595
    %659 = vmatprep.subr.mxu0 0.0
    %660 = vmatpush1.msra.mxu0 %v596
    %661 = vmatprep.subr.mxu0 0.0
    %662 = vmatpush1.msra.mxu0 %v597
    %663 = vmatprep.subr.mxu0 0.0
    %664 = vmatpush1.msra.mxu0 %v598
    %665 = vmatprep.subr.mxu0 0.0
    %666 = vmatpush1.msra.mxu0 %v599
    %667 = vmatprep.subr.mxu0 0.0
    %668 = vmatpush1.msra.mxu0 %v600
    %669 = vmatprep.subr.mxu0 0.0
    %670 = vmatpush1.msra.mxu0 %v601
    %671 = vmatprep.subr.mxu0 0.0
    %672 = vmatpush1.msra.mxu0 %v602
    %673 = vmatprep.subr.mxu0 0.0
    %674 = vmatpush1.msra.mxu0 %v603
    %675 = vmatprep.mubr.f32.mxu0 %v571
    %676 = vmatmul.mubr.f32.gmra.mrb[0].mxu0 %v570
    %v677 = vpop.f32.mrb[0].mxu0
    %v678 = vadd.f32 %v609, %v677
    %v679 = vpop.f32.mrb[0].mxu0
    %680 = vdwg.mxu0
    %v681 = vmax.f32 %v678, 0.0
    %v682 = vld [vmem:[#allocation10] sm:$0xff]
    %v683 = vld [vmem:[#allocation10 + $0x8] sm:$0xff]
    %v684 = vld [vmem:[#allocation10 + $0x10] sm:$0xff]
    %v685 = vld [vmem:[#allocation10 + $0x18] sm:$0xff]
    %v686 = vld [vmem:[#allocation10 + $0x20] sm:$0xff]
    %v687 = vld [vmem:[#allocation10 + $0x28] sm:$0xff]
    %v688 = vld [vmem:[#allocation10 + $0x30] sm:$0xff]
    %v689 = vld [vmem:[#allocation10 + $0x38] sm:$0xff]
    %v690 = vld [vmem:[#allocation10 + $0x40] sm:$0xff]
    %v691 = vld [vmem:[#allocation10 + $0x48] sm:$0xff]
    %v692 = vld [vmem:[#allocation10 + $0x50] sm:$0xff]
    %v693 = vld [vmem:[#allocation10 + $0x58] sm:$0xff]
    %v694 = vld [vmem:[#allocation10 + $0x60] sm:$0xff]
    %v695 = vld [vmem:[#allocation10 + $0x68] sm:$0xff]
    %v696 = vld [vmem:[#allocation10 + $0x70] sm:$0xff]
    %v697 = vld [vmem:[#allocation10 + $0x78] sm:$0xff]
    %v698 = vld [vmem:[%s8] sm:$0x1]
    %v700 = vlaneseq
    %v701 = vshrl.u32 %v700, 7
    %v702 = vsub.s32 0, %v701
    %v703 = vrot.slane %v698, %v702
    %705 = vmatprep.subr.mxu0 0.0
    %706 = vmatpush1.msra.mxu0 %v682
    %707 = vmatprep.subr.mxu0 0.0
    %708 = vmatpush1.msra.mxu0 %v683
    %709 = vmatprep.subr.mxu0 0.0
    %710 = vmatpush1.msra.mxu0 %v684
    %711 = vmatprep.subr.mxu0 0.0
    %712 = vmatpush1.msra.mxu0 %v685
    %713 = vmatprep.subr.mxu0 0.0
    %714 = vmatpush1.msra.mxu0 %v686
    %715 = vmatprep.subr.mxu0 0.0
    %716 = vmatpush1.msra.mxu0 %v687
    %717 = vmatprep.subr.mxu0 0.0
    %718 = vmatpush1.msra.mxu0 %v688
    %719 = vmatprep.subr.mxu0 0.0
    %720 = vmatpush1.msra.mxu0 %v689
    %721 = vmatprep.subr.mxu0 0.0
    %722 = vmatpush1.msra.mxu0 %v690
    %723 = vmatprep.subr.mxu0 0.0
    %724 = vmatpush1.msra.mxu0 %v691
    %725 = vmatprep.subr.mxu0 0.0
    %726 = vmatpush1.msra.mxu0 %v692
    %727 = vmatprep.subr.mxu0 0.0
    %728 = vmatpush1.msra.mxu0 %v693
    %729 = vmatprep.subr.mxu0 0.0
    %730 = vmatpush1.msra.mxu0 %v694
    %731 = vmatprep.subr.mxu0 0.0
    %732 = vmatpush1.msra.mxu0 %v695
    %733 = vmatprep.subr.mxu0 0.0
    %734 = vmatpush1.msra.mxu0 %v696
    %735 = vmatprep.subr.mxu0 0.0
    %736 = vmatpush1.msra.mxu0 %v697
    %737 = vmatprep.subr.mxu0 0.0
    %738 = vmatpush1.msra.mxu0 0.0
    %739 = vmatprep.subr.mxu0 0.0
    %740 = vmatpush1.msra.mxu0 0.0
    %741 = vmatprep.subr.mxu0 0.0
    %742 = vmatpush1.msra.mxu0 0.0
    %743 = vmatprep.subr.mxu0 0.0
    %744 = vmatpush1.msra.mxu0 0.0
    %745 = vmatprep.subr.mxu0 0.0
    %746 = vmatpush1.msra.mxu0 0.0
    %747 = vmatprep.subr.mxu0 0.0
    %748 = vmatpush1.msra.mxu0 0.0
    %749 = vmatprep.subr.mxu0 0.0
    %750 = vmatpush1.msra.mxu0 0.0
    %751 = vmatprep.subr.mxu0 0.0
    %752 = vmatpush1.msra.mxu0 0.0
    %753 = vmatprep.subr.mxu0 0.0
    %754 = vmatpush1.msra.mxu0 0.0
    %755 = vmatprep.subr.mxu0 0.0
    %756 = vmatpush1.msra.mxu0 0.0
    %757 = vmatprep.subr.mxu0 0.0
    %758 = vmatpush1.msra.mxu0 0.0
    %759 = vmatprep.subr.mxu0 0.0
    %760 = vmatpush1.msra.mxu0 0.0
    %761 = vmatprep.subr.mxu0 0.0
    %762 = vmatpush1.msra.mxu0 0.0
    %763 = vmatprep.subr.mxu0 0.0
    %764 = vmatpush1.msra.mxu0 0.0
    %765 = vmatprep.subr.mxu0 0.0
    %766 = vmatpush1.msra.mxu0 0.0
    %767 = vmatprep.subr.mxu0 0.0
    %768 = vmatpush1.msra.mxu0 0.0
    %769 = vmatprep.mubr.f32.mxu0 0.0
    %770 = vmatmul.mubr.f32.gmra.mrb[0].mxu0 %v681
    %v771 = vpop.f32.mrb[0].mxu0
    %v772 = vadd.f32 %v703, %v771
    %v773 = vpop.f32.mrb[0].mxu0
    %774 = vdwg.mxu0
    %775 = vst [vmem:[#allocation11] sm:$0xff] %v772
    // Predicated region
    $region58: #{tpu_custom_call.1} parent=1 // pred_check
      _
    $region59: #{tpu_custom_call.1} parent=1 // pred_check_branch
      %777 = sbr.rel (0) target = $region61
    $region60: #{tpu_custom_call.1} parent=1 // pred_region
      %s779 = ssub.s32 128, 128
      %780 = vsyncadd [#allocation4], %s779
      %s782 = sshll.u32 [#allocation11], 4
      %s783 = int_to_ptr.vmem [resolvable:$true] %s782
      %785 = dma.vmem_to_hbm [thread:$0]  %s783, 128, %s9, [#allocation4]
    $region61: #{tpu_custom_call.1} parent=1 // pred_fallthru
      _
    // Predicated region
    $region62: #{tpu_custom_call.1} parent=1 // pred_check
      _
    $region63: #{tpu_custom_call.1} parent=1 // pred_check_branch
      %787 = sbr.rel (0) target = $region65
    $region64: #{tpu_custom_call.1} parent=1 // pred_region
      %788 = dma.done [#allocation4], 128
    $region65: #{tpu_custom_call.1} parent=1 // pred_fallthru
      _
    %789 = vsyncpa [#allocation3], 1
    %790 = vsyncpa [#allocation6], 1
    %791 = vsyncpa [#allocation9], 1
    %792 = vsyncpa [#allocation4], 1

</llo_original>
